<compile_context>
chip_gen: v7x
topology: tpu7x:2x2x1
jax: 0.10.0
libtpu: 0.0.40
codegen_flags: <defaults>
</compile_context>

<pallas_src>
import jax
import jax.numpy as jnp
from jax.experimental import pallas as pl
from jax.experimental.pallas import tpu as pltpu


IM_DIM = 34
HIDDEN = 128          # hidden_dim in the PyTorch module


def _round_up(n, m):
    return ((n + m - 1) // m) * m


def _cdiv(a, b):
    return -(-a // b)


def _leaky_relu(x, slope=0.2):
    return jnp.where(x > 0, x, slope * x)


def disc_kernel(x_ref,
                w1_ref, b1_ref,
                w2_ref, b2_ref,
                w3_ref, b3_ref,
                w4_ref, b4_ref,
                o_ref):
    """Fused 4-layer MLP: three (Linear + LeakyReLU(0.2)) blocks, final Linear.

    x_ref:  (TB, 34)    bf16 input tile (batch-padded only)
    w1_ref: (34, 512)   bf16
    w2_ref: (512, 256)  bf16
    w3_ref: (256, 128)  bf16
    w4_ref: (1, 128)    f32 (final layer done on VPU + lane reduction)
    b*_ref: (1, d)      f32
    o_ref:  (TB, 1)     f32 logits
    """
    # Layer 1: (TB,34)@(34,512), bf16 operands, f32 accumulate.
    h = jnp.dot(x_ref[...], w1_ref[...],
                preferred_element_type=jnp.float32) + b1_ref[...]
    h = _leaky_relu(h)

    # Layer 2: (TB,512)@(512,256)
    h = jnp.dot(h.astype(jnp.bfloat16), w2_ref[...],
                preferred_element_type=jnp.float32) + b2_ref[...]
    h = _leaky_relu(h)

    # Layer 3: (TB,256)@(256,128)
    h = jnp.dot(h.astype(jnp.bfloat16), w3_ref[...],
                preferred_element_type=jnp.float32) + b3_ref[...]
    h = _leaky_relu(h)

    # Layer 4: (128 -> 1) as VPU multiply + lane reduction (MXU has no slack to
    # waste on a padded 128-wide output; XLU/VPU slots are free here).
    out = jnp.sum(h * w4_ref[...], axis=-1, keepdims=True) + b4_ref[...]

    o_ref[...] = out.astype(o_ref.dtype)


def prepare_params(params):
    """Cast hidden-layer weights to bf16; reshape final layer for the VPU path."""
    (w1, b1), (w2, b2), (w3, b3), (w4, b4) = params
    w1b = w1.astype(jnp.bfloat16)
    w2b = w2.astype(jnp.bfloat16)
    w3b = w3.astype(jnp.bfloat16)
    w4r = jnp.transpose(w4).astype(jnp.float32)      # (128, 1) -> (1, 128)
    b4r = b4.reshape(1, 1).astype(jnp.float32)
    return ((w1b, b1.astype(jnp.float32)),
            (w2b, b2.astype(jnp.float32)),
            (w3b, b3.astype(jnp.float32)),
            (w4r, b4r))


def _choose_tiles(batch):
    """Pick (tb, padded_batch, n_tiles): tb <= 1024, minimal tail padding,
    and >= 2 grid steps for batches > 16 (v7x megacore)."""
    if batch <= 16:
        n = 1
    else:
        n = max(2, _cdiv(batch, 1024))
    tb = _round_up(_cdiv(batch, n), 16)   # multiple of 16: clean bf16 sublane packing
    return tb, n * tb, n


def discriminator_forward(x, params):
    """x: (batch, IM_DIM) float32. params: list of (W, b) with W in (in, out)."""
    (w1, b1), (w2, b2), (w3, b3), (w4, b4) = prepare_params(params)
    batch = x.shape[0]

    tb, padded_batch, n_tiles = _choose_tiles(batch)
    grid = (n_tiles,)

    # bf16 input; pad only on the batch dim (no K padding materialized in HBM).
    x_bf = x.astype(jnp.bfloat16)
    if padded_batch > batch:
        x_bf = jnp.pad(x_bf, ((0, padded_batch - batch), (0, 0)))

    d1, d2, d3 = w1.shape[1], w2.shape[1], w3.shape[1]

    const = lambda i: (0, 0)   # weights/biases stay VMEM-resident across the grid
    in_specs = [
        pl.BlockSpec((tb, IM_DIM), lambda i: (i, 0)),     # x tile (34 == full dim)
        pl.BlockSpec((IM_DIM, d1), const),                # w1 bf16
        pl.BlockSpec((1, d1), const),                     # b1
        pl.BlockSpec((d1, d2), const),                    # w2 bf16
        pl.BlockSpec((1, d2), const),                     # b2
        pl.BlockSpec((d2, d3), const),                    # w3 bf16
        pl.BlockSpec((1, d3), const),                     # b3
        pl.BlockSpec((1, d3), const),                     # w4 row (f32)
        pl.BlockSpec((1, 1), const),                      # b4
    ]
    out_spec = pl.BlockSpec((tb, 1), lambda i: (i, 0))    # narrow (batch, 1) output

    flops = 2 * batch * (IM_DIM * d1 + d1 * d2 + d2 * d3 + d3 * 1)
    bytes_accessed = (
        2 * padded_batch * IM_DIM                          # x in (bf16)
        + 2 * (IM_DIM * d1 + d1 * d2 + d2 * d3)            # bf16 weights
        + 4 * (d1 + d2 + d3 + d3 + 1)                      # f32 biases + w4 row + b4
        + 4 * padded_batch * 1                             # out (f32)
    )

    out_padded = pl.pallas_call(
        disc_kernel,
        out_shape=jax.ShapeDtypeStruct((padded_batch, 1), jnp.float32),
        grid=grid,
        in_specs=in_specs,
        out_specs=out_spec,
        compiler_params=pltpu.CompilerParams(
            dimension_semantics=("parallel",)),
        cost_estimate=pl.CostEstimate(
            flops=flops, transcendentals=0, bytes_accessed=bytes_accessed),
    )(x_bf, w1, b1, w2, b2, w3, b3, w4, b4)

    return out_padded[:batch]


def init_params(key, im_dim=IM_DIM, hidden_dim=HIDDEN):
    """Deterministic init mimicking PyTorch nn.Linear default (uniform +/- 1/sqrt(fan_in)).

    Weights are stored as (in_dim, out_dim) (transposed vs. PyTorch's (out, in))."""
    dims = [(im_dim, hidden_dim * 4),
            (hidden_dim * 4, hidden_dim * 2),
            (hidden_dim * 2, hidden_dim),
            (hidden_dim, 1)]
    params = []
    for (din, dout) in dims:
        key, kw, kb = jax.random.split(key, 3)
        bound = 1.0 / jnp.sqrt(jnp.float32(din))
        w = jax.random.uniform(kw, (din, dout), jnp.float32, -bound, bound)
        b = jax.random.uniform(kb, (1, dout), jnp.float32, -bound, bound)
        params.append((w, b))
    return params


def reference_forward(x, params):
    """Pure-JAX f32 reference for correctness checking (unmodified params)."""
    h = x
    for i, (w, b) in enumerate(params):
        h = h @ w + b
        if i < len(params) - 1:
            h = jnp.where(h > 0, h, 0.2 * h)
    return h


if __name__ == "__main__":
    key = jax.random.PRNGKey(0)
    key, kx = jax.random.split(key)

    batch = 8
    x = jax.random.normal(kx, (batch, IM_DIM), jnp.float32)
    params = init_params(key)

    out = discriminator_forward(x, params)
    out = jax.block_until_ready(out)

    ref = reference_forward(x, params)
    assert out.shape == (batch, 1), out.shape
    # bf16 matmul operands with f32 accumulation -> loosened tolerance.
    assert jnp.allclose(out, ref, atol=2e-2, rtol=2e-2), (
        "mismatch vs reference: max abs diff = "
        f"{float(jnp.max(jnp.abs(out - ref)))}")

    print("KERNEL_OK")
</pallas_src>

<mosaic_0001>
module attributes {stable_mosaic.version = 11 : i64} {
  func.func @disc_kernel(%arg0: i32, %arg1: memref<16x34xbf16, #tpu.memory_space<vmem>>, %arg2: memref<34x512xbf16, #tpu.memory_space<vmem>>, %arg3: memref<1x512xf32, #tpu.memory_space<vmem>>, %arg4: memref<512x256xbf16, #tpu.memory_space<vmem>>, %arg5: memref<1x256xf32, #tpu.memory_space<vmem>>, %arg6: memref<256x128xbf16, #tpu.memory_space<vmem>>, %arg7: memref<1x128xf32, #tpu.memory_space<vmem>>, %arg8: memref<1x128xf32, #tpu.memory_space<vmem>>, %arg9: memref<1x1xf32, #tpu.memory_space<vmem>>, %arg10: memref<16x1xf32, #tpu.memory_space<vmem>>) attributes {dimension_semantics = [#tpu.dimension_semantics<parallel>], iteration_bounds = array<i64: 1>, scalar_prefetch = 0 : i64, scratch_operands = 0 : i64, tpu.core_type = #tpu.core_type<tc>, window_params = [{transform_indices = @transform_0, window_bounds = array<i64: 16, 34>}, {pipeline_mode = #tpu.pipeline_mode<synchronous>, transform_indices = @transform_1, window_bounds = array<i64: 34, 512>}, {pipeline_mode = #tpu.pipeline_mode<synchronous>, transform_indices = @transform_2, window_bounds = array<i64: 1, 512>}, {pipeline_mode = #tpu.pipeline_mode<synchronous>, transform_indices = @transform_3, window_bounds = array<i64: 512, 256>}, {pipeline_mode = #tpu.pipeline_mode<synchronous>, transform_indices = @transform_4, window_bounds = array<i64: 1, 256>}, {pipeline_mode = #tpu.pipeline_mode<synchronous>, transform_indices = @transform_5, window_bounds = array<i64: 256, 128>}, {pipeline_mode = #tpu.pipeline_mode<synchronous>, transform_indices = @transform_6, window_bounds = array<i64: 1, 128>}, {pipeline_mode = #tpu.pipeline_mode<synchronous>, transform_indices = @transform_7, window_bounds = array<i64: 1, 128>}, {pipeline_mode = #tpu.pipeline_mode<synchronous>, transform_indices = @transform_8, window_bounds = array<i64: 1, 1>}, {transform_indices = @transform_9, window_bounds = array<i64: 16, 1>}]} {
    %c0 = arith.constant 0 : index
    %c0_0 = arith.constant 0 : index
    %0 = vector.load %arg1[%c0, %c0_0] : memref<16x34xbf16, #tpu.memory_space<vmem>>, vector<16x34xbf16>
    %c0_1 = arith.constant 0 : index
    %c0_2 = arith.constant 0 : index
    %1 = vector.load %arg2[%c0_1, %c0_2] : memref<34x512xbf16, #tpu.memory_space<vmem>>, vector<34x512xbf16>
    %cst = arith.constant dense<0.000000e+00> : vector<16x512xf32>
    %2 = tpu.matmul %0, %1, %cst {dimension_numbers = #tpu.dot_dimension_numbers<[1], [0], [0], [1], [0, 0, 1, 1], [], []>} : vector<16x34xbf16>, vector<34x512xbf16>, vector<16x512xf32> -> vector<16x512xf32>
    %c0_3 = arith.constant 0 : index
    %c0_4 = arith.constant 0 : index
    %3 = vector.load %arg3[%c0_3, %c0_4] : memref<1x512xf32, #tpu.memory_space<vmem>>, vector<1x512xf32>
    %4 = vector.broadcast %3 : vector<1x512xf32> to vector<16x512xf32>
    %5 = arith.addf %2, %4 : vector<16x512xf32>
    %cst_5 = arith.constant 0.000000e+00 : f32
    %6 = vector.broadcast %cst_5 : f32 to vector<16x512xf32>
    %7 = arith.cmpf ogt, %5, %6 : vector<16x512xf32>
    %cst_6 = arith.constant 2.000000e-01 : f32
    %8 = vector.broadcast %cst_6 : f32 to vector<16x512xf32>
    %9 = arith.mulf %8, %5 : vector<16x512xf32>
    %10 = arith.select %7, %5, %9 : vector<16x512xi1>, vector<16x512xf32>
    %11 = arith.truncf %10 : vector<16x512xf32> to vector<16x512xbf16>
    %c0_7 = arith.constant 0 : index
    %c0_8 = arith.constant 0 : index
    %12 = vector.load %arg4[%c0_7, %c0_8] : memref<512x256xbf16, #tpu.memory_space<vmem>>, vector<512x256xbf16>
    %cst_9 = arith.constant dense<0.000000e+00> : vector<16x256xf32>
    %13 = tpu.matmul %11, %12, %cst_9 {dimension_numbers = #tpu.dot_dimension_numbers<[1], [0], [0], [1], [0, 0, 1, 1], [], []>} : vector<16x512xbf16>, vector<512x256xbf16>, vector<16x256xf32> -> vector<16x256xf32>
    %c0_10 = arith.constant 0 : index
    %c0_11 = arith.constant 0 : index
    %14 = vector.load %arg5[%c0_10, %c0_11] : memref<1x256xf32, #tpu.memory_space<vmem>>, vector<1x256xf32>
    %15 = vector.broadcast %14 : vector<1x256xf32> to vector<16x256xf32>
    %16 = arith.addf %13, %15 : vector<16x256xf32>
    %cst_12 = arith.constant 0.000000e+00 : f32
    %17 = vector.broadcast %cst_12 : f32 to vector<16x256xf32>
    %18 = arith.cmpf ogt, %16, %17 : vector<16x256xf32>
    %cst_13 = arith.constant 2.000000e-01 : f32
    %19 = vector.broadcast %cst_13 : f32 to vector<16x256xf32>
    %20 = arith.mulf %19, %16 : vector<16x256xf32>
    %21 = arith.select %18, %16, %20 : vector<16x256xi1>, vector<16x256xf32>
    %22 = arith.truncf %21 : vector<16x256xf32> to vector<16x256xbf16>
    %c0_14 = arith.constant 0 : index
    %c0_15 = arith.constant 0 : index
    %23 = vector.load %arg6[%c0_14, %c0_15] : memref<256x128xbf16, #tpu.memory_space<vmem>>, vector<256x128xbf16>
    %cst_16 = arith.constant dense<0.000000e+00> : vector<16x128xf32>
    %24 = tpu.matmul %22, %23, %cst_16 {dimension_numbers = #tpu.dot_dimension_numbers<[1], [0], [0], [1], [0, 0, 1, 1], [], []>} : vector<16x256xbf16>, vector<256x128xbf16>, vector<16x128xf32> -> vector<16x128xf32>
    %c0_17 = arith.constant 0 : index
    %c0_18 = arith.constant 0 : index
    %25 = vector.load %arg7[%c0_17, %c0_18] : memref<1x128xf32, #tpu.memory_space<vmem>>, vector<1x128xf32>
    %26 = vector.broadcast %25 : vector<1x128xf32> to vector<16x128xf32>
    %27 = arith.addf %24, %26 : vector<16x128xf32>
    %cst_19 = arith.constant 0.000000e+00 : f32
    %28 = vector.broadcast %cst_19 : f32 to vector<16x128xf32>
    %29 = arith.cmpf ogt, %27, %28 : vector<16x128xf32>
    %cst_20 = arith.constant 2.000000e-01 : f32
    %30 = vector.broadcast %cst_20 : f32 to vector<16x128xf32>
    %31 = arith.mulf %30, %27 : vector<16x128xf32>
    %32 = arith.select %29, %27, %31 : vector<16x128xi1>, vector<16x128xf32>
    %c0_21 = arith.constant 0 : index
    %c0_22 = arith.constant 0 : index
    %33 = vector.load %arg8[%c0_21, %c0_22] : memref<1x128xf32, #tpu.memory_space<vmem>>, vector<1x128xf32>
    %34 = vector.broadcast %33 : vector<1x128xf32> to vector<16x128xf32>
    %35 = arith.mulf %32, %34 : vector<16x128xf32>
    %cst_23 = arith.constant dense<0.000000e+00> : vector<16xf32>
    %36 = vector.multi_reduction <add>, %35, %cst_23 [1] : vector<16x128xf32> to vector<16xf32>
    %37 = vector.shape_cast %36 : vector<16xf32> to vector<16x1xf32>
    %c0_24 = arith.constant 0 : index
    %c0_25 = arith.constant 0 : index
    %38 = vector.load %arg9[%c0_24, %c0_25] : memref<1x1xf32, #tpu.memory_space<vmem>>, vector<1x1xf32>
    %39 = vector.broadcast %38 : vector<1x1xf32> to vector<16x1xf32>
    %40 = arith.addf %37, %39 : vector<16x1xf32>
    %c0_26 = arith.constant 0 : index
    %c0_27 = arith.constant 0 : index
    %41 = vector.load %arg10[%c0_26, %c0_27] : memref<16x1xf32, #tpu.memory_space<vmem>>, vector<16x1xf32>
    tpu.vector_store %arg10[%c0_26, %c0_27], %40 {strides = array<i32>} : memref<16x1xf32, #tpu.memory_space<vmem>>, vector<16x1xf32>,
    return
  }
  func.func @transform_0(%arg0: i32) -> (i32, i32) {
    %c0_i32 = arith.constant 0 : i32
    %c0_i32_0 = arith.constant 0 : i32
    return %arg0, %c0_i32 : i32, i32
  }
  func.func @transform_1(%arg0: i32) -> (i32, i32) {
    %c0_i32 = arith.constant 0 : i32
    %c0_i32_0 = arith.constant 0 : i32
    %c0_i32_1 = arith.constant 0 : i32
    return %c0_i32, %c0_i32_0 : i32, i32
  }
  func.func @transform_2(%arg0: i32) -> (i32, i32) {
    %c0_i32 = arith.constant 0 : i32
    %c0_i32_0 = arith.constant 0 : i32
    %c0_i32_1 = arith.constant 0 : i32
    return %c0_i32, %c0_i32_0 : i32, i32
  }
  func.func @transform_3(%arg0: i32) -> (i32, i32) {
    %c0_i32 = arith.constant 0 : i32
    %c0_i32_0 = arith.constant 0 : i32
    %c0_i32_1 = arith.constant 0 : i32
    return %c0_i32, %c0_i32_0 : i32, i32
  }
  func.func @transform_4(%arg0: i32) -> (i32, i32) {
    %c0_i32 = arith.constant 0 : i32
    %c0_i32_0 = arith.constant 0 : i32
    %c0_i32_1 = arith.constant 0 : i32
    return %c0_i32, %c0_i32_0 : i32, i32
  }
  func.func @transform_5(%arg0: i32) -> (i32, i32) {
    %c0_i32 = arith.constant 0 : i32
    %c0_i32_0 = arith.constant 0 : i32
    %c0_i32_1 = arith.constant 0 : i32
    return %c0_i32, %c0_i32_0 : i32, i32
  }
  func.func @transform_6(%arg0: i32) -> (i32, i32) {
    %c0_i32 = arith.constant 0 : i32
    %c0_i32_0 = arith.constant 0 : i32
    %c0_i32_1 = arith.constant 0 : i32
    return %c0_i32, %c0_i32_0 : i32, i32
  }
  func.func @transform_7(%arg0: i32) -> (i32, i32) {
    %c0_i32 = arith.constant 0 : i32
    %c0_i32_0 = arith.constant 0 : i32
    %c0_i32_1 = arith.constant 0 : i32
    return %c0_i32, %c0_i32_0 : i32, i32
  }
  func.func @transform_8(%arg0: i32) -> (i32, i32) {
    %c0_i32 = arith.constant 0 : i32
    %c0_i32_0 = arith.constant 0 : i32
    %c0_i32_1 = arith.constant 0 : i32
    return %c0_i32, %c0_i32_0 : i32, i32
  }
  func.func @transform_9(%arg0: i32) -> (i32, i32) {
    %c0_i32 = arith.constant 0 : i32
    %c0_i32_0 = arith.constant 0 : i32
    return %arg0, %c0_i32 : i32, i32
  }
}

</mosaic_0001>

<llo_original>
// kernel: tpu_custom_call.1
$region0: #{tpu_custom_call.1}
  #allocation0 [shape = 'u32[]', space=smem, size = 0x4, offset = 0x4, fixed_abs, tag = 'smem constant byte address 0x4 - core index']
  #allocation1 [shape = 'u32[144,128]{1,0:T(1,128)}', space=vmem, size = 0x12000, scoped, tag = 'internal scratch']
  #allocation2 [shape = 'f32[1,1]{1,0:T(1,128)S(1)}', space=vmem, size = 0x200, scoped, tag = 'scoped memory for tpu_custom_call.1']
  %s0 = inlined_call_operand.hbm [shape: bf16[16,34], index: 0, kind: input, shape index: {}]
  %s1 = inlined_call_operand.hbm [shape: bf16[34,512], index: 1, kind: input, shape index: {}]
  %s2 = inlined_call_operand.vmem [shape: f32[1,512], index: 2, kind: input, shape index: {}]
  %s3 = inlined_call_operand.hbm [shape: bf16[512,256], index: 3, kind: input, shape index: {}]
  %s4 = inlined_call_operand.vmem [shape: f32[1,256], index: 4, kind: input, shape index: {}]
  %s5 = inlined_call_operand.hbm [shape: bf16[256,128], index: 5, kind: input, shape index: {}]
  %s6 = inlined_call_operand.vmem [shape: f32[1,128], index: 6, kind: input, shape index: {}]
  %s7 = inlined_call_operand.vmem [shape: f32[1,128], index: 7, kind: input, shape index: {}]
  %s8 = inlined_call_operand.<no memory space> [shape: f32[1,1], index: 8, kind: input, shape index: {}]
  %s9 = inlined_call_operand.vmem [shape: f32[16,1], index: 9, kind: output, shape index: {}]
  %s10 = sld [smem:[#allocation0]]
  $region62: #{tpu_custom_call.1} parent=0
    _
  %s12 = ssub.s32 1, %s10
  %s13 = scalar_select 0, %s12, %s10
  %v14 = vstv %s8
  %15 = vst [vmem:[#allocation2] sm:$0x1] %v14
  $region1: #{tpu_custom_call.1} parent=0
    #allocation3 [shape = 'u8[4096]{0}', space=vmem, size = 0x1000, scoped, tag = 'input window, operand 0, single buffered']
    #allocation4 [shape = 's32[1]{0}', space=sflag, size = 0x4, scoped, tag = 'scoped memory for tpu_custom_call.1']
    #allocation5 [shape = 'u8[40960]{0}', space=vmem, size = 0xa000, scoped, tag = 'input window, operand 1, single buffered']
    #allocation6 [shape = 's32[1]{0}', space=sflag, size = 0x4, scoped, tag = 'scoped memory for tpu_custom_call.1']
    #allocation7 [shape = 'u8[262144]{0}', space=vmem, size = 0x40000, scoped, tag = 'input window, operand 3, single buffered']
    #allocation8 [shape = 'u8[65536]{0}', space=vmem, size = 0x10000, scoped, tag = 'input window, operand 5, single buffered']
    #allocation9 [shape = 's32[1]{0}', space=sflag, size = 0x4, scoped, tag = 'scoped memory for tpu_custom_call.1']
    %16 = vsyncpa [#allocation4], 0
    %17 = vsyncpa [#allocation6], 0
    %18 = vsyncpa [#allocation9], 0
    // Predicated region
    $region2: #{tpu_custom_call.1} parent=1 // pred_check
      _
    $region3: #{tpu_custom_call.1} parent=1 // pred_check_branch
      %20 = sbr.rel (0) target = $region5
    $region4: #{tpu_custom_call.1} parent=1 // pred_region
      %s22 = ssub.s32 128, 128
      %23 = vsyncadd [#allocation4], %s22
      %s24 = sshll.u32 [#allocation3], 4
      %s25 = int_to_ptr.vmem [resolvable:$true] %s24
      %30 = dma.hbm_to_vmem [thread:$0]  %s0, 128, %s25, [#allocation4], 64, 64, 4
    $region5: #{tpu_custom_call.1} parent=1 // pred_fallthru
      _
    // Predicated region
    $region6: #{tpu_custom_call.1} parent=1 // pred_check
      _
    $region7: #{tpu_custom_call.1} parent=1 // pred_check_branch
      %32 = sbr.rel (0) target = $region9
    $region8: #{tpu_custom_call.1} parent=1 // pred_region
      %s34 = ssub.s32 1280, 1280
      %35 = vsyncadd [#allocation6], %s34
      %s36 = sshll.u32 [#allocation5], 4
      %s37 = int_to_ptr.vmem [resolvable:$true] %s36
      %42 = dma.hbm_to_vmem [thread:$0]  %s1, 1280, %s37, [#allocation6], 256, 256, 16
    $region9: #{tpu_custom_call.1} parent=1 // pred_fallthru
      _
    // Predicated region
    $region10: #{tpu_custom_call.1} parent=1 // pred_check
      _
    $region11: #{tpu_custom_call.1} parent=1 // pred_check_branch
      %44 = sbr.rel (0) target = $region13
    $region12: #{tpu_custom_call.1} parent=1 // pred_region
      _
    $region13: #{tpu_custom_call.1} parent=1 // pred_fallthru
      _
    // Predicated region
    $region14: #{tpu_custom_call.1} parent=1 // pred_check
      _
    $region15: #{tpu_custom_call.1} parent=1 // pred_check_branch
      %46 = sbr.rel (0) target = $region17
    $region16: #{tpu_custom_call.1} parent=1 // pred_region
      %s48 = ssub.s32 8192, 8192
      %49 = vsyncadd [#allocation6], %s48
      %s50 = sshll.u32 [#allocation7], 4
      %s51 = int_to_ptr.vmem [resolvable:$true] %s50
      %56 = dma.hbm_to_vmem [thread:$0]  %s3, 8192, %s51, [#allocation6], 128, 128, 8
    $region17: #{tpu_custom_call.1} parent=1 // pred_fallthru
      _
    // Predicated region
    $region18: #{tpu_custom_call.1} parent=1 // pred_check
      _
    $region19: #{tpu_custom_call.1} parent=1 // pred_check_branch
      %58 = sbr.rel (0) target = $region21
    $region20: #{tpu_custom_call.1} parent=1 // pred_region
      _
    $region21: #{tpu_custom_call.1} parent=1 // pred_fallthru
      _
    // Predicated region
    $region22: #{tpu_custom_call.1} parent=1 // pred_check
      _
    $region23: #{tpu_custom_call.1} parent=1 // pred_check_branch
      %60 = sbr.rel (0) target = $region25
    $region24: #{tpu_custom_call.1} parent=1 // pred_region
      %s62 = ssub.s32 2048, 2048
      %63 = vsyncadd [#allocation9], %s62
      %s64 = sshll.u32 [#allocation8], 4
      %s65 = int_to_ptr.vmem [resolvable:$true] %s64
      %70 = dma.hbm_to_vmem [thread:$0]  %s5, 2048, %s65, [#allocation9], 64, 64, 4
    $region25: #{tpu_custom_call.1} parent=1 // pred_fallthru
      _
    // Predicated region
    $region26: #{tpu_custom_call.1} parent=1 // pred_check
      _
    $region27: #{tpu_custom_call.1} parent=1 // pred_check_branch
      %72 = sbr.rel (0) target = $region29
    $region28: #{tpu_custom_call.1} parent=1 // pred_region
      _
    $region29: #{tpu_custom_call.1} parent=1 // pred_fallthru
      _
    // Predicated region
    $region30: #{tpu_custom_call.1} parent=1 // pred_check
      _
    $region31: #{tpu_custom_call.1} parent=1 // pred_check_branch
      %74 = sbr.rel (0) target = $region33
    $region32: #{tpu_custom_call.1} parent=1 // pred_region
      _
    $region33: #{tpu_custom_call.1} parent=1 // pred_fallthru
      _
    // Predicated region
    $region34: #{tpu_custom_call.1} parent=1 // pred_check
      _
    $region35: #{tpu_custom_call.1} parent=1 // pred_check_branch
      %76 = sbr.rel (0) target = $region37
    $region36: #{tpu_custom_call.1} parent=1 // pred_region
      _
    $region37: #{tpu_custom_call.1} parent=1 // pred_fallthru
      _
    // Predicated region
    $region38: #{tpu_custom_call.1} parent=1 // pred_check
      _
    $region39: #{tpu_custom_call.1} parent=1 // pred_check_branch
      %78 = sbr.rel (0) target = $region41
    $region40: #{tpu_custom_call.1} parent=1 // pred_region
      %79 = dma.done [#allocation4], 128
    $region41: #{tpu_custom_call.1} parent=1 // pred_fallthru
      _
    // Predicated region
    $region42: #{tpu_custom_call.1} parent=1 // pred_check
      _
    $region43: #{tpu_custom_call.1} parent=1 // pred_check_branch
      %81 = sbr.rel (0) target = $region45
    $region44: #{tpu_custom_call.1} parent=1 // pred_region
      %82 = dma.done [#allocation6], 1280
    $region45: #{tpu_custom_call.1} parent=1 // pred_fallthru
      _
    // Predicated region
    $region46: #{tpu_custom_call.1} parent=1 // pred_check
      _
    $region47: #{tpu_custom_call.1} parent=1 // pred_check_branch
      %84 = sbr.rel (0) target = $region49
    $region48: #{tpu_custom_call.1} parent=1 // pred_region
      %85 = dma.done [#allocation6], 8192
    $region49: #{tpu_custom_call.1} parent=1 // pred_fallthru
      _
    // Predicated region
    $region50: #{tpu_custom_call.1} parent=1 // pred_check
      _
    $region51: #{tpu_custom_call.1} parent=1 // pred_check_branch
      %87 = sbr.rel (0) target = $region53
    $region52: #{tpu_custom_call.1} parent=1 // pred_region
      %88 = dma.done [#allocation9], 2048
    $region53: #{tpu_custom_call.1} parent=1 // pred_fallthru
      _
    %v90 = vld [vmem:[#allocation3] sm:$0xf]
    %v91 = vld [vmem:[#allocation3 + $0x4] sm:$0xf]
    %v92 = vld [vmem:[#allocation5] sm:$0xff]
    %v93 = vld [vmem:[#allocation5 + $0x8] sm:$0xff]
    %v94 = vld [vmem:[#allocation5 + $0x10] sm:$0xff]
    %v95 = vld [vmem:[#allocation5 + $0x18] sm:$0xff]
    %v96 = vld [vmem:[#allocation5 + $0x20] sm:$0xff]
    %v97 = vld [vmem:[#allocation5 + $0x28] sm:$0xff]
    %v98 = vld [vmem:[#allocation5 + $0x30] sm:$0xff]
    %v99 = vld [vmem:[#allocation5 + $0x38] sm:$0xff]
    %v100 = vld [vmem:[#allocation5 + $0x40] sm:$0x11]
    %v101 = vld [vmem:[#allocation5 + $0x48] sm:$0x11]
    %v102 = vld [vmem:[%s2] sm:$0xf]
    %v104 = vlaneseq
    %v105 = vshrl.u32 %v104, 7
    %v106 = vsub.s32 0, %v105
    %v107 = vrot.slane %v102, %v106
    %v108 = vlaneseq
    %v109 = vshrl.u32 %v108, 7
    %v110 = vsub.s32 1, %v109
    %v111 = vrot.slane %v102, %v110
    %v112 = vlaneseq
    %v113 = vshrl.u32 %v112, 7
    %v114 = vsub.s32 2, %v113
    %v115 = vrot.slane %v102, %v114
    %v116 = vlaneseq
    %v117 = vshrl.u32 %v116, 7
    %v118 = vsub.s32 3, %v117
    %v119 = vrot.slane %v102, %v118
    %v126 = vunpack.c.l.b16 %v90
    %v127 = vunpack.c.l.b16 %v91
    %v128 = vpack.c.b16 %v127, %v126
    %v139 = vunpack.c.l.b16 %v92
    %v140 = vunpack.c.h.b16 %v92
    %v141 = vunpack.c.l.b16 %v93
    %v142 = vunpack.c.h.b16 %v93
    %v143 = vunpack.c.l.b16 %v94
    %v144 = vunpack.c.h.b16 %v94
    %v145 = vunpack.c.l.b16 %v95
    %v146 = vunpack.c.h.b16 %v95
    %v147 = vunpack.c.l.b16 %v96
    %v148 = vunpack.c.h.b16 %v96
    %v149 = vunpack.c.l.b16 %v97
    %v150 = vunpack.c.h.b16 %v97
    %v151 = vunpack.c.l.b16 %v98
    %v152 = vunpack.c.h.b16 %v98
    %v153 = vunpack.c.l.b16 %v99
    %v154 = vunpack.c.h.b16 %v99
    %v155 = vunpack.c.l.b16 %v100
    %v156 = vunpack.c.h.b16 %v100
    %v157 = vunpack.c.l.b16 %v101
    %v158 = vunpack.c.h.b16 %v101
    %v159 = vpack.c.b16 %v143, %v139
    %v160 = vpack.c.b16 %v144, %v140
    %v161 = vpack.c.b16 %v145, %v141
    %v162 = vpack.c.b16 %v146, %v142
    %v163 = vpack.c.b16 %v151, %v147
    %v164 = vpack.c.b16 %v152, %v148
    %v165 = vpack.c.b16 %v153, %v149
    %v166 = vpack.c.b16 %v154, %v150
    %v167 = vpack.c.b16 %v155, %v155
    %v168 = vpack.c.b16 %v156, %v156
    %v169 = vpack.c.b16 %v157, %v157
    %v170 = vpack.c.b16 %v158, %v158
    %vm179 = vcmask 277504
    %v181 = vsel %vm179, %v128, 0
    %vm183 = vcmask 1040384
    %v185 = vsel %vm183, %v167, 0
    %v188 = vsel %vm183, %v168, 0
    %v191 = vsel %vm183, %v169, 0
    %v194 = vsel %vm183, %v170, 0
    %196 = vmatprep.subr.bf16.mxu0 %v160
    %197 = vmatpush1.bf16.msra.mxu0 %v159
    %198 = vmatprep.subr.bf16.mxu0 %v164
    %199 = vmatpush1.bf16.msra.mxu0 %v163
    %200 = vmatprep.subr.bf16.mxu0 %v188
    %201 = vmatpush1.bf16.msra.mxu0 %v185
    %202 = vmatprep.subr.bf16.mxu0 0
    %203 = vmatpush1.bf16.msra.mxu0 0
    %204 = vmatprep.subr.bf16.mxu0 0
    %205 = vmatpush1.bf16.msra.mxu0 0
    %206 = vmatprep.subr.bf16.mxu0 0
    %207 = vmatpush1.bf16.msra.mxu0 0
    %208 = vmatprep.subr.bf16.mxu0 0
    %209 = vmatpush1.bf16.msra.mxu0 0
    %210 = vmatprep.subr.bf16.mxu0 0
    %211 = vmatpush1.bf16.msra.mxu0 0
    %212 = vmatprep.subr.bf16.mxu0 0
    %213 = vmatpush1.bf16.msra.mxu0 0
    %214 = vmatprep.subr.bf16.mxu0 0
    %215 = vmatpush1.bf16.msra.mxu0 0
    %216 = vmatprep.subr.bf16.mxu0 0
    %217 = vmatpush1.bf16.msra.mxu0 0
    %218 = vmatprep.subr.bf16.mxu0 0
    %219 = vmatpush1.bf16.msra.mxu0 0
    %220 = vmatprep.subr.bf16.mxu0 0
    %221 = vmatpush1.bf16.msra.mxu0 0
    %222 = vmatprep.subr.bf16.mxu0 0
    %223 = vmatpush1.bf16.msra.mxu0 0
    %224 = vmatprep.subr.bf16.mxu0 0
    %225 = vmatpush1.bf16.msra.mxu0 0
    %226 = vmatprep.subr.bf16.mxu0 0
    %227 = vmatpush1.bf16.msra.mxu0 0
    %228 = vmatprep.mubr.bf16.mxu0 0
    %229 = vmatmul.mubr.bf16.gmra.mrb[0].mxu0 %v181
    %v230 = vpop.f32.mrb[0].mxu0
    %v231 = vadd.f32 %v107, %v230
    %v232 = vpop.f32.mrb[0].mxu0
    %v233 = vadd.f32 %v111, %v232
    %v234 = vpop.f32.mrb[0].mxu0
    %v235 = vadd.f32 %v107, %v234
    %v236 = vpop.f32.mrb[0].mxu0
    %v237 = vadd.f32 %v111, %v236
    %238 = vdwg.mxu0
    %239 = vmatprep.subr.bf16.mxu0 %v162
    %240 = vmatpush1.bf16.msra.mxu0 %v161
    %241 = vmatprep.subr.bf16.mxu0 %v166
    %242 = vmatpush1.bf16.msra.mxu0 %v165
    %243 = vmatprep.subr.bf16.mxu0 %v194
    %244 = vmatpush1.bf16.msra.mxu0 %v191
    %245 = vmatprep.subr.bf16.mxu0 0
    %246 = vmatpush1.bf16.msra.mxu0 0
    %247 = vmatprep.subr.bf16.mxu0 0
    %248 = vmatpush1.bf16.msra.mxu0 0
    %249 = vmatprep.subr.bf16.mxu0 0
    %250 = vmatpush1.bf16.msra.mxu0 0
    %251 = vmatprep.subr.bf16.mxu0 0
    %252 = vmatpush1.bf16.msra.mxu0 0
    %253 = vmatprep.subr.bf16.mxu0 0
    %254 = vmatpush1.bf16.msra.mxu0 0
    %255 = vmatprep.subr.bf16.mxu0 0
    %256 = vmatpush1.bf16.msra.mxu0 0
    %257 = vmatprep.subr.bf16.mxu0 0
    %258 = vmatpush1.bf16.msra.mxu0 0
    %259 = vmatprep.subr.bf16.mxu0 0
    %260 = vmatpush1.bf16.msra.mxu0 0
    %261 = vmatprep.subr.bf16.mxu0 0
    %262 = vmatpush1.bf16.msra.mxu0 0
    %263 = vmatprep.subr.bf16.mxu0 0
    %264 = vmatpush1.bf16.msra.mxu0 0
    %265 = vmatprep.subr.bf16.mxu0 0
    %266 = vmatpush1.bf16.msra.mxu0 0
    %267 = vmatprep.subr.bf16.mxu0 0
    %268 = vmatpush1.bf16.msra.mxu0 0
    %269 = vmatprep.subr.bf16.mxu0 0
    %270 = vmatpush1.bf16.msra.mxu0 0
    %271 = vmatprep.mubr.bf16.mxu0 0
    %272 = vmatmul.mubr.bf16.gmra.mrb[0].mxu0 %v181
    %v273 = vpop.f32.mrb[0].mxu0
    %v274 = vadd.f32 %v115, %v273
    %v275 = vpop.f32.mrb[0].mxu0
    %v276 = vadd.f32 %v119, %v275
    %v277 = vpop.f32.mrb[0].mxu0
    %v278 = vadd.f32 %v115, %v277
    %v279 = vpop.f32.mrb[0].mxu0
    %v280 = vadd.f32 %v119, %v279
    %281 = vdwg.mxu0
    %vm282 = vcmp.gt.f32.partialorder %v231, 0.0
    %vm283 = vcmp.gt.f32.partialorder %v233, 0.0
    %vm284 = vcmp.gt.f32.partialorder %v274, 0.0
    %vm285 = vcmp.gt.f32.partialorder %v276, 0.0
    %vm286 = vcmp.gt.f32.partialorder %v235, 0.0
    %vm287 = vcmp.gt.f32.partialorder %v237, 0.0
    %vm288 = vcmp.gt.f32.partialorder %v278, 0.0
    %vm289 = vcmp.gt.f32.partialorder %v280, 0.0
    %v290 = vmul.f32 %v231, 0.2
    %v291 = vmul.f32 %v233, 0.2
    %v292 = vmul.f32 %v274, 0.2
    %v293 = vmul.f32 %v276, 0.2
    %v294 = vmul.f32 %v235, 0.2
    %v295 = vmul.f32 %v237, 0.2
    %v296 = vmul.f32 %v278, 0.2
    %v297 = vmul.f32 %v280, 0.2
    %v298 = vsel %vm282, %v231, %v290
    %v299 = vsel %vm283, %v233, %v291
    %v300 = vsel %vm284, %v274, %v292
    %v301 = vsel %vm285, %v276, %v293
    %v302 = vsel %vm286, %v235, %v294
    %v303 = vsel %vm287, %v237, %v295
    %v304 = vsel %vm288, %v278, %v296
    %v305 = vsel %vm289, %v280, %v297
    %v306 = vpack.c.bf16 %v302, %v298
    %v307 = vpack.c.bf16 %v303, %v299
    %v308 = vpack.c.bf16 %v304, %v300
    %v309 = vpack.c.bf16 %v305, %v301
    %v310 = vld [vmem:[#allocation7] sm:$0xff]
    %v311 = vld [vmem:[#allocation7 + $0x8] sm:$0xff]
    %v312 = vld [vmem:[#allocation7 + $0x10] sm:$0xff]
    %v313 = vld [vmem:[#allocation7 + $0x18] sm:$0xff]
    %v314 = vld [vmem:[#allocation7 + $0x20] sm:$0xff]
    %v315 = vld [vmem:[#allocation7 + $0x28] sm:$0xff]
    %v316 = vld [vmem:[#allocation7 + $0x30] sm:$0xff]
    %v317 = vld [vmem:[#allocation7 + $0x38] sm:$0xff]
    %v318 = vld [vmem:[#allocation7 + $0x40] sm:$0xff]
    %v319 = vld [vmem:[#allocation7 + $0x48] sm:$0xff]
    %v320 = vld [vmem:[#allocation7 + $0x50] sm:$0xff]
    %v321 = vld [vmem:[#allocation7 + $0x58] sm:$0xff]
    %v322 = vld [vmem:[#allocation7 + $0x60] sm:$0xff]
    %v323 = vld [vmem:[#allocation7 + $0x68] sm:$0xff]
    %v324 = vld [vmem:[#allocation7 + $0x70] sm:$0xff]
    %v325 = vld [vmem:[#allocation7 + $0x78] sm:$0xff]
    %v326 = vld [vmem:[#allocation7 + $0x80] sm:$0xff]
    %v327 = vld [vmem:[#allocation7 + $0x88] sm:$0xff]
    %v328 = vld [vmem:[#allocation7 + $0x90] sm:$0xff]
    %v329 = vld [vmem:[#allocation7 + $0x98] sm:$0xff]
    %v330 = vld [vmem:[#allocation7 + $0xa0] sm:$0xff]
    %v331 = vld [vmem:[#allocation7 + $0xa8] sm:$0xff]
    %v332 = vld [vmem:[#allocation7 + $0xb0] sm:$0xff]
    %v333 = vld [vmem:[#allocation7 + $0xb8] sm:$0xff]
    %v334 = vld [vmem:[#allocation7 + $0xc0] sm:$0xff]
    %v335 = vld [vmem:[#allocation7 + $0xc8] sm:$0xff]
    %v336 = vld [vmem:[#allocation7 + $0xd0] sm:$0xff]
    %v337 = vld [vmem:[#allocation7 + $0xd8] sm:$0xff]
    %v338 = vld [vmem:[#allocation7 + $0xe0] sm:$0xff]
    %v339 = vld [vmem:[#allocation7 + $0xe8] sm:$0xff]
    %v340 = vld [vmem:[#allocation7 + $0xf0] sm:$0xff]
    %v341 = vld [vmem:[#allocation7 + $0xf8] sm:$0xff]
    %v342 = vld [vmem:[#allocation7 + $0x100] sm:$0xff]
    %v343 = vld [vmem:[#allocation7 + $0x108] sm:$0xff]
    %v344 = vld [vmem:[#allocation7 + $0x110] sm:$0xff]
    %v345 = vld [vmem:[#allocation7 + $0x118] sm:$0xff]
    %v346 = vld [vmem:[#allocation7 + $0x120] sm:$0xff]
    %v347 = vld [vmem:[#allocation7 + $0x128] sm:$0xff]
    %v348 = vld [vmem:[#allocation7 + $0x130] sm:$0xff]
    %v349 = vld [vmem:[#allocation7 + $0x138] sm:$0xff]
    %v350 = vld [vmem:[#allocation7 + $0x140] sm:$0xff]
    %v351 = vld [vmem:[#allocation7 + $0x148] sm:$0xff]
    %v352 = vld [vmem:[#allocation7 + $0x150] sm:$0xff]
    %v353 = vld [vmem:[#allocation7 + $0x158] sm:$0xff]
    %v354 = vld [vmem:[#allocation7 + $0x160] sm:$0xff]
    %v355 = vld [vmem:[#allocation7 + $0x168] sm:$0xff]
    %v356 = vld [vmem:[#allocation7 + $0x170] sm:$0xff]
    %v357 = vld [vmem:[#allocation7 + $0x178] sm:$0xff]
    %v358 = vld [vmem:[#allocation7 + $0x180] sm:$0xff]
    %v359 = vld [vmem:[#allocation7 + $0x188] sm:$0xff]
    %v360 = vld [vmem:[#allocation7 + $0x190] sm:$0xff]
    %v361 = vld [vmem:[#allocation7 + $0x198] sm:$0xff]
    %v362 = vld [vmem:[#allocation7 + $0x1a0] sm:$0xff]
    %v363 = vld [vmem:[#allocation7 + $0x1a8] sm:$0xff]
    %v364 = vld [vmem:[#allocation7 + $0x1b0] sm:$0xff]
    %v365 = vld [vmem:[#allocation7 + $0x1b8] sm:$0xff]
    %v366 = vld [vmem:[#allocation7 + $0x1c0] sm:$0xff]
    %v367 = vld [vmem:[#allocation7 + $0x1c8] sm:$0xff]
    %v368 = vld [vmem:[#allocation7 + $0x1d0] sm:$0xff]
    %v369 = vld [vmem:[#allocation7 + $0x1d8] sm:$0xff]
    %v370 = vld [vmem:[#allocation7 + $0x1e0] sm:$0xff]
    %v371 = vld [vmem:[#allocation7 + $0x1e8] sm:$0xff]
    %v372 = vld [vmem:[#allocation7 + $0x1f0] sm:$0xff]
    %v373 = vld [vmem:[#allocation7 + $0x1f8] sm:$0xff]
    %v374 = vld [vmem:[%s4] sm:$0x3]
    %v376 = vlaneseq
    %v377 = vshrl.u32 %v376, 7
    %v378 = vsub.s32 0, %v377
    %v379 = vrot.slane %v374, %v378
    %v380 = vlaneseq
    %v381 = vshrl.u32 %v380, 7
    %v382 = vsub.s32 1, %v381
    %v383 = vrot.slane %v374, %v382
    %v450 = vunpack.c.l.b16 %v310
    %v451 = vunpack.c.h.b16 %v310
    %v452 = vunpack.c.l.b16 %v311
    %v453 = vunpack.c.h.b16 %v311
    %v454 = vunpack.c.l.b16 %v312
    %v455 = vunpack.c.h.b16 %v312
    %v456 = vunpack.c.l.b16 %v313
    %v457 = vunpack.c.h.b16 %v313
    %v458 = vunpack.c.l.b16 %v314
    %v459 = vunpack.c.h.b16 %v314
    %v460 = vunpack.c.l.b16 %v315
    %v461 = vunpack.c.h.b16 %v315
    %v462 = vunpack.c.l.b16 %v316
    %v463 = vunpack.c.h.b16 %v316
    %v464 = vunpack.c.l.b16 %v317
    %v465 = vunpack.c.h.b16 %v317
    %v466 = vunpack.c.l.b16 %v318
    %v467 = vunpack.c.h.b16 %v318
    %v468 = vunpack.c.l.b16 %v319
    %v469 = vunpack.c.h.b16 %v319
    %v470 = vunpack.c.l.b16 %v320
    %v471 = vunpack.c.h.b16 %v320
    %v472 = vunpack.c.l.b16 %v321
    %v473 = vunpack.c.h.b16 %v321
    %v474 = vunpack.c.l.b16 %v322
    %v475 = vunpack.c.h.b16 %v322
    %v476 = vunpack.c.l.b16 %v323
    %v477 = vunpack.c.h.b16 %v323
    %v478 = vunpack.c.l.b16 %v324
    %v479 = vunpack.c.h.b16 %v324
    %v480 = vunpack.c.l.b16 %v325
    %v481 = vunpack.c.h.b16 %v325
    %v482 = vunpack.c.l.b16 %v326
    %v483 = vunpack.c.h.b16 %v326
    %v484 = vunpack.c.l.b16 %v327
    %v485 = vunpack.c.h.b16 %v327
    %v486 = vunpack.c.l.b16 %v328
    %v487 = vunpack.c.h.b16 %v328
    %v488 = vunpack.c.l.b16 %v329
    %v489 = vunpack.c.h.b16 %v329
    %v490 = vunpack.c.l.b16 %v330
    %v491 = vunpack.c.h.b16 %v330
    %v492 = vunpack.c.l.b16 %v331
    %v493 = vunpack.c.h.b16 %v331
    %v494 = vunpack.c.l.b16 %v332
    %v495 = vunpack.c.h.b16 %v332
    %v496 = vunpack.c.l.b16 %v333
    %v497 = vunpack.c.h.b16 %v333
    %v498 = vunpack.c.l.b16 %v334
    %v499 = vunpack.c.h.b16 %v334
    %v500 = vunpack.c.l.b16 %v335
    %v501 = vunpack.c.h.b16 %v335
    %v502 = vunpack.c.l.b16 %v336
    %v503 = vunpack.c.h.b16 %v336
    %v504 = vunpack.c.l.b16 %v337
    %v505 = vunpack.c.h.b16 %v337
    %v506 = vunpack.c.l.b16 %v338
    %v507 = vunpack.c.h.b16 %v338
    %v508 = vunpack.c.l.b16 %v339
    %v509 = vunpack.c.h.b16 %v339
    %v510 = vunpack.c.l.b16 %v340
    %v511 = vunpack.c.h.b16 %v340
    %v512 = vunpack.c.l.b16 %v341
    %v513 = vunpack.c.h.b16 %v341
    %v514 = vunpack.c.l.b16 %v342
    %v515 = vunpack.c.h.b16 %v342
    %v516 = vunpack.c.l.b16 %v343
    %v517 = vunpack.c.h.b16 %v343
    %v518 = vunpack.c.l.b16 %v344
    %v519 = vunpack.c.h.b16 %v344
    %v520 = vunpack.c.l.b16 %v345
    %v521 = vunpack.c.h.b16 %v345
    %v522 = vunpack.c.l.b16 %v346
    %v523 = vunpack.c.h.b16 %v346
    %v524 = vunpack.c.l.b16 %v347
    %v525 = vunpack.c.h.b16 %v347
    %v526 = vunpack.c.l.b16 %v348
    %v527 = vunpack.c.h.b16 %v348
    %v528 = vunpack.c.l.b16 %v349
    %v529 = vunpack.c.h.b16 %v349
    %v530 = vunpack.c.l.b16 %v350
    %v531 = vunpack.c.h.b16 %v350
    %v532 = vunpack.c.l.b16 %v351
    %v533 = vunpack.c.h.b16 %v351
    %v534 = vunpack.c.l.b16 %v352
    %v535 = vunpack.c.h.b16 %v352
    %v536 = vunpack.c.l.b16 %v353
    %v537 = vunpack.c.h.b16 %v353
    %v538 = vunpack.c.l.b16 %v354
    %v539 = vunpack.c.h.b16 %v354
    %v540 = vunpack.c.l.b16 %v355
    %v541 = vunpack.c.h.b16 %v355
    %v542 = vunpack.c.l.b16 %v356
    %v543 = vunpack.c.h.b16 %v356
    %v544 = vunpack.c.l.b16 %v357
    %v545 = vunpack.c.h.b16 %v357
    %v546 = vunpack.c.l.b16 %v358
    %v547 = vunpack.c.h.b16 %v358
    %v548 = vunpack.c.l.b16 %v359
    %v549 = vunpack.c.h.b16 %v359
    %v550 = vunpack.c.l.b16 %v360
    %v551 = vunpack.c.h.b16 %v360
    %v552 = vunpack.c.l.b16 %v361
    %v553 = vunpack.c.h.b16 %v361
    %v554 = vunpack.c.l.b16 %v362
    %v555 = vunpack.c.h.b16 %v362
    %v556 = vunpack.c.l.b16 %v363
    %v557 = vunpack.c.h.b16 %v363
    %v558 = vunpack.c.l.b16 %v364
    %v559 = vunpack.c.h.b16 %v364
    %v560 = vunpack.c.l.b16 %v365
    %v561 = vunpack.c.h.b16 %v365
    %v562 = vunpack.c.l.b16 %v366
    %v563 = vunpack.c.h.b16 %v366
    %v564 = vunpack.c.l.b16 %v367
    %v565 = vunpack.c.h.b16 %v367
    %v566 = vunpack.c.l.b16 %v368
    %v567 = vunpack.c.h.b16 %v368
    %v568 = vunpack.c.l.b16 %v369
    %v569 = vunpack.c.h.b16 %v369
    %v570 = vunpack.c.l.b16 %v370
    %v571 = vunpack.c.h.b16 %v370
    %v572 = vunpack.c.l.b16 %v371
    %v573 = vunpack.c.h.b16 %v371
    %v574 = vunpack.c.l.b16 %v372
    %v575 = vunpack.c.h.b16 %v372
    %v576 = vunpack.c.l.b16 %v373
    %v577 = vunpack.c.h.b16 %v373
    %v578 = vpack.c.b16 %v452, %v450
    %v579 = vpack.c.b16 %v453, %v451
    %v580 = vpack.c.b16 %v456, %v454
    %v581 = vpack.c.b16 %v457, %v455
    %v582 = vpack.c.b16 %v460, %v458
    %v583 = vpack.c.b16 %v461, %v459
    %v584 = vpack.c.b16 %v464, %v462
    %v585 = vpack.c.b16 %v465, %v463
    %v586 = vpack.c.b16 %v468, %v466
    %v587 = vpack.c.b16 %v469, %v467
    %v588 = vpack.c.b16 %v472, %v470
    %v589 = vpack.c.b16 %v473, %v471
    %v590 = vpack.c.b16 %v476, %v474
    %v591 = vpack.c.b16 %v477, %v475
    %v592 = vpack.c.b16 %v480, %v478
    %v593 = vpack.c.b16 %v481, %v479
    %v594 = vpack.c.b16 %v484, %v482
    %v595 = vpack.c.b16 %v485, %v483
    %v596 = vpack.c.b16 %v488, %v486
    %v597 = vpack.c.b16 %v489, %v487
    %v598 = vpack.c.b16 %v492, %v490
    %v599 = vpack.c.b16 %v493, %v491
    %v600 = vpack.c.b16 %v496, %v494
    %v601 = vpack.c.b16 %v497, %v495
    %v602 = vpack.c.b16 %v500, %v498
    %v603 = vpack.c.b16 %v501, %v499
    %v604 = vpack.c.b16 %v504, %v502
    %v605 = vpack.c.b16 %v505, %v503
    %v606 = vpack.c.b16 %v508, %v506
    %v607 = vpack.c.b16 %v509, %v507
    %v608 = vpack.c.b16 %v512, %v510
    %v609 = vpack.c.b16 %v513, %v511
    %v610 = vpack.c.b16 %v516, %v514
    %v611 = vpack.c.b16 %v517, %v515
    %v612 = vpack.c.b16 %v520, %v518
    %v613 = vpack.c.b16 %v521, %v519
    %v614 = vpack.c.b16 %v524, %v522
    %v615 = vpack.c.b16 %v525, %v523
    %v616 = vpack.c.b16 %v528, %v526
    %v617 = vpack.c.b16 %v529, %v527
    %v618 = vpack.c.b16 %v532, %v530
    %v619 = vpack.c.b16 %v533, %v531
    %v620 = vpack.c.b16 %v536, %v534
    %v621 = vpack.c.b16 %v537, %v535
    %v622 = vpack.c.b16 %v540, %v538
    %v623 = vpack.c.b16 %v541, %v539
    %v624 = vpack.c.b16 %v544, %v542
    %v625 = vpack.c.b16 %v545, %v543
    %v626 = vpack.c.b16 %v548, %v546
    %v627 = vpack.c.b16 %v549, %v547
    %v628 = vpack.c.b16 %v552, %v550
    %v629 = vpack.c.b16 %v553, %v551
    %v630 = vpack.c.b16 %v556, %v554
    %v631 = vpack.c.b16 %v557, %v555
    %v632 = vpack.c.b16 %v560, %v558
    %v633 = vpack.c.b16 %v561, %v559
    %v634 = vpack.c.b16 %v564, %v562
    %v635 = vpack.c.b16 %v565, %v563
    %v636 = vpack.c.b16 %v568, %v566
    %v637 = vpack.c.b16 %v569, %v567
    %v638 = vpack.c.b16 %v572, %v570
    %v639 = vpack.c.b16 %v573, %v571
    %v640 = vpack.c.b16 %v576, %v574
    %v641 = vpack.c.b16 %v577, %v575
    %706 = vmatprep.subr.bf16.mxu0 %v579
    %707 = vmatpush1.bf16.msra.mxu0 %v578
    %708 = vmatprep.subr.bf16.mxu0 %v581
    %709 = vmatpush1.bf16.msra.mxu0 %v580
    %710 = vmatprep.subr.bf16.mxu0 %v583
    %711 = vmatpush1.bf16.msra.mxu0 %v582
    %712 = vmatprep.subr.bf16.mxu0 %v585
    %713 = vmatpush1.bf16.msra.mxu0 %v584
    %714 = vmatprep.subr.bf16.mxu0 %v587
    %715 = vmatpush1.bf16.msra.mxu0 %v586
    %716 = vmatprep.subr.bf16.mxu0 %v589
    %717 = vmatpush1.bf16.msra.mxu0 %v588
    %718 = vmatprep.subr.bf16.mxu0 %v591
    %719 = vmatpush1.bf16.msra.mxu0 %v590
    %720 = vmatprep.subr.bf16.mxu0 %v593
    %721 = vmatpush1.bf16.msra.mxu0 %v592
    %722 = vmatprep.subr.bf16.mxu0 %v595
    %723 = vmatpush1.bf16.msra.mxu0 %v594
    %724 = vmatprep.subr.bf16.mxu0 %v597
    %725 = vmatpush1.bf16.msra.mxu0 %v596
    %726 = vmatprep.subr.bf16.mxu0 %v599
    %727 = vmatpush1.bf16.msra.mxu0 %v598
    %728 = vmatprep.subr.bf16.mxu0 %v601
    %729 = vmatpush1.bf16.msra.mxu0 %v600
    %730 = vmatprep.subr.bf16.mxu0 %v603
    %731 = vmatpush1.bf16.msra.mxu0 %v602
    %732 = vmatprep.subr.bf16.mxu0 %v605
    %733 = vmatpush1.bf16.msra.mxu0 %v604
    %734 = vmatprep.subr.bf16.mxu0 %v607
    %735 = vmatpush1.bf16.msra.mxu0 %v606
    %736 = vmatprep.subr.bf16.mxu0 %v609
    %737 = vmatpush1.bf16.msra.mxu0 %v608
    %738 = vmatprep.mubr.bf16.mxu0 %v307
    %739 = vmatmul.mubr.bf16.gmra.mrb[0].mxu0 %v306
    %v740 = vpop.f32.mrb[0].mxu0
    %v741 = vadd.f32 %v379, %v740
    %v742 = vpop.f32.mrb[0].mxu0
    %v743 = vadd.f32 %v383, %v742
    %v744 = vpop.f32.mrb[0].mxu0
    %v745 = vadd.f32 %v379, %v744
    %v746 = vpop.f32.mrb[0].mxu0
    %v747 = vadd.f32 %v383, %v746
    %748 = vdwg.mxu0
    %749 = vmatprep.subr.bf16.mxu0 %v611
    %750 = vmatpush1.bf16.msra.mxu0 %v610
    %751 = vmatprep.subr.bf16.mxu0 %v613
    %752 = vmatpush1.bf16.msra.mxu0 %v612
    %753 = vmatprep.subr.bf16.mxu0 %v615
    %754 = vmatpush1.bf16.msra.mxu0 %v614
    %755 = vmatprep.subr.bf16.mxu0 %v617
    %756 = vmatpush1.bf16.msra.mxu0 %v616
    %757 = vmatprep.subr.bf16.mxu0 %v619
    %758 = vmatpush1.bf16.msra.mxu0 %v618
    %759 = vmatprep.subr.bf16.mxu0 %v621
    %760 = vmatpush1.bf16.msra.mxu0 %v620
    %761 = vmatprep.subr.bf16.mxu0 %v623
    %762 = vmatpush1.bf16.msra.mxu0 %v622
    %763 = vmatprep.subr.bf16.mxu0 %v625
    %764 = vmatpush1.bf16.msra.mxu0 %v624
    %765 = vmatprep.subr.bf16.mxu0 %v627
    %766 = vmatpush1.bf16.msra.mxu0 %v626
    %767 = vmatprep.subr.bf16.mxu0 %v629
    %768 = vmatpush1.bf16.msra.mxu0 %v628
    %769 = vmatprep.subr.bf16.mxu0 %v631
    %770 = vmatpush1.bf16.msra.mxu0 %v630
    %771 = vmatprep.subr.bf16.mxu0 %v633
    %772 = vmatpush1.bf16.msra.mxu0 %v632
    %773 = vmatprep.subr.bf16.mxu0 %v635
    %774 = vmatpush1.bf16.msra.mxu0 %v634
    %775 = vmatprep.subr.bf16.mxu0 %v637
    %776 = vmatpush1.bf16.msra.mxu0 %v636
    %777 = vmatprep.subr.bf16.mxu0 %v639
    %778 = vmatpush1.bf16.msra.mxu0 %v638
    %779 = vmatprep.subr.bf16.mxu0 %v641
    %780 = vmatpush1.bf16.msra.mxu0 %v640
    %781 = vmatprep.mubr.bf16.mxu0 %v309
    %782 = vmatmul.mubr.bf16.gmra.mrb[0].mxu0 %v308
    %v783 = vpop.f32.mrb[0].mxu0
    %v784 = vadd.f32 %v741, %v783
    %v785 = vpop.f32.mrb[0].mxu0
    %v786 = vadd.f32 %v743, %v785
    %v787 = vpop.f32.mrb[0].mxu0
    %v788 = vadd.f32 %v745, %v787
    %v789 = vpop.f32.mrb[0].mxu0
    %v790 = vadd.f32 %v747, %v789
    %791 = vdwg.mxu0
    %vm792 = vcmp.gt.f32.partialorder %v784, 0.0
    %vm793 = vcmp.gt.f32.partialorder %v786, 0.0
    %vm794 = vcmp.gt.f32.partialorder %v788, 0.0
    %vm795 = vcmp.gt.f32.partialorder %v790, 0.0
    %v796 = vmul.f32 %v784, 0.2
    %v797 = vmul.f32 %v786, 0.2
    %v798 = vmul.f32 %v788, 0.2
    %v799 = vmul.f32 %v790, 0.2
    %v800 = vsel %vm792, %v784, %v796
    %v801 = vsel %vm793, %v786, %v797
    %v802 = vsel %vm794, %v788, %v798
    %v803 = vsel %vm795, %v790, %v799
    %v804 = vpack.c.bf16 %v802, %v800
    %v805 = vpack.c.bf16 %v803, %v801
    %v806 = vld [vmem:[#allocation8] sm:$0xf]
    %v807 = vld [vmem:[#allocation8 + $0x4] sm:$0xf]
    %v808 = vld [vmem:[#allocation8 + $0x8] sm:$0xf]
    %v809 = vld [vmem:[#allocation8 + $0xc] sm:$0xf]
    %v810 = vld [vmem:[#allocation8 + $0x10] sm:$0xf]
    %v811 = vld [vmem:[#allocation8 + $0x14] sm:$0xf]
    %v812 = vld [vmem:[#allocation8 + $0x18] sm:$0xf]
    %v813 = vld [vmem:[#allocation8 + $0x1c] sm:$0xf]
    %v814 = vld [vmem:[#allocation8 + $0x20] sm:$0xf]
    %v815 = vld [vmem:[#allocation8 + $0x24] sm:$0xf]
    %v816 = vld [vmem:[#allocation8 + $0x28] sm:$0xf]
    %v817 = vld [vmem:[#allocation8 + $0x2c] sm:$0xf]
    %v818 = vld [vmem:[#allocation8 + $0x30] sm:$0xf]
    %v819 = vld [vmem:[#allocation8 + $0x34] sm:$0xf]
    %v820 = vld [vmem:[#allocation8 + $0x38] sm:$0xf]
    %v821 = vld [vmem:[#allocation8 + $0x3c] sm:$0xf]
    %v822 = vld [vmem:[#allocation8 + $0x40] sm:$0xf]
    %v823 = vld [vmem:[#allocation8 + $0x44] sm:$0xf]
    %v824 = vld [vmem:[#allocation8 + $0x48] sm:$0xf]
    %v825 = vld [vmem:[#allocation8 + $0x4c] sm:$0xf]
    %v826 = vld [vmem:[#allocation8 + $0x50] sm:$0xf]
    %v827 = vld [vmem:[#allocation8 + $0x54] sm:$0xf]
    %v828 = vld [vmem:[#allocation8 + $0x58] sm:$0xf]
    %v829 = vld [vmem:[#allocation8 + $0x5c] sm:$0xf]
    %v830 = vld [vmem:[#allocation8 + $0x60] sm:$0xf]
    %v831 = vld [vmem:[#allocation8 + $0x64] sm:$0xf]
    %v832 = vld [vmem:[#allocation8 + $0x68] sm:$0xf]
    %v833 = vld [vmem:[#allocation8 + $0x6c] sm:$0xf]
    %v834 = vld [vmem:[#allocation8 + $0x70] sm:$0xf]
    %v835 = vld [vmem:[#allocation8 + $0x74] sm:$0xf]
    %v836 = vld [vmem:[#allocation8 + $0x78] sm:$0xf]
    %v837 = vld [vmem:[#allocation8 + $0x7c] sm:$0xf]
    %v838 = vld [vmem:[%s6] sm:$0x1]
    %v840 = vlaneseq
    %v841 = vshrl.u32 %v840, 7
    %v842 = vsub.s32 0, %v841
    %v843 = vrot.slane %v838, %v842
    %v877 = vunpack.c.l.b16 %v806
    %v878 = vunpack.c.l.b16 %v807
    %v879 = vunpack.c.l.b16 %v808
    %v880 = vunpack.c.l.b16 %v809
    %v881 = vunpack.c.l.b16 %v810
    %v882 = vunpack.c.l.b16 %v811
    %v883 = vunpack.c.l.b16 %v812
    %v884 = vunpack.c.l.b16 %v813
    %v885 = vunpack.c.l.b16 %v814
    %v886 = vunpack.c.l.b16 %v815
    %v887 = vunpack.c.l.b16 %v816
    %v888 = vunpack.c.l.b16 %v817
    %v889 = vunpack.c.l.b16 %v818
    %v890 = vunpack.c.l.b16 %v819
    %v891 = vunpack.c.l.b16 %v820
    %v892 = vunpack.c.l.b16 %v821
    %v893 = vunpack.c.l.b16 %v822
    %v894 = vunpack.c.l.b16 %v823
    %v895 = vunpack.c.l.b16 %v824
    %v896 = vunpack.c.l.b16 %v825
    %v897 = vunpack.c.l.b16 %v826
    %v898 = vunpack.c.l.b16 %v827
    %v899 = vunpack.c.l.b16 %v828
    %v900 = vunpack.c.l.b16 %v829
    %v901 = vunpack.c.l.b16 %v830
    %v902 = vunpack.c.l.b16 %v831
    %v903 = vunpack.c.l.b16 %v832
    %v904 = vunpack.c.l.b16 %v833
    %v905 = vunpack.c.l.b16 %v834
    %v906 = vunpack.c.l.b16 %v835
    %v907 = vunpack.c.l.b16 %v836
    %v908 = vunpack.c.l.b16 %v837
    %v909 = vpack.c.b16 %v878, %v877
    %v910 = vpack.c.b16 %v880, %v879
    %v911 = vpack.c.b16 %v882, %v881
    %v912 = vpack.c.b16 %v884, %v883
    %v913 = vpack.c.b16 %v886, %v885
    %v914 = vpack.c.b16 %v888, %v887
    %v915 = vpack.c.b16 %v890, %v889
    %v916 = vpack.c.b16 %v892, %v891
    %v917 = vpack.c.b16 %v894, %v893
    %v918 = vpack.c.b16 %v896, %v895
    %v919 = vpack.c.b16 %v898, %v897
    %v920 = vpack.c.b16 %v900, %v899
    %v921 = vpack.c.b16 %v902, %v901
    %v922 = vpack.c.b16 %v904, %v903
    %v923 = vpack.c.b16 %v906, %v905
    %v924 = vpack.c.b16 %v908, %v907
    %941 = vmatprep.subr.bf16.mxu0 0
    %942 = vmatpush1.bf16.msra.mxu0 %v909
    %943 = vmatprep.subr.bf16.mxu0 0
    %944 = vmatpush1.bf16.msra.mxu0 %v910
    %945 = vmatprep.subr.bf16.mxu0 0
    %946 = vmatpush1.bf16.msra.mxu0 %v911
    %947 = vmatprep.subr.bf16.mxu0 0
    %948 = vmatpush1.bf16.msra.mxu0 %v912
    %949 = vmatprep.subr.bf16.mxu0 0
    %950 = vmatpush1.bf16.msra.mxu0 %v913
    %951 = vmatprep.subr.bf16.mxu0 0
    %952 = vmatpush1.bf16.msra.mxu0 %v914
    %953 = vmatprep.subr.bf16.mxu0 0
    %954 = vmatpush1.bf16.msra.mxu0 %v915
    %955 = vmatprep.subr.bf16.mxu0 0
    %956 = vmatpush1.bf16.msra.mxu0 %v916
    %957 = vmatprep.subr.bf16.mxu0 0
    %958 = vmatpush1.bf16.msra.mxu0 %v917
    %959 = vmatprep.subr.bf16.mxu0 0
    %960 = vmatpush1.bf16.msra.mxu0 %v918
    %961 = vmatprep.subr.bf16.mxu0 0
    %962 = vmatpush1.bf16.msra.mxu0 %v919
    %963 = vmatprep.subr.bf16.mxu0 0
    %964 = vmatpush1.bf16.msra.mxu0 %v920
    %965 = vmatprep.subr.bf16.mxu0 0
    %966 = vmatpush1.bf16.msra.mxu0 %v921
    %967 = vmatprep.subr.bf16.mxu0 0
    %968 = vmatpush1.bf16.msra.mxu0 %v922
    %969 = vmatprep.subr.bf16.mxu0 0
    %970 = vmatpush1.bf16.msra.mxu0 %v923
    %971 = vmatprep.subr.bf16.mxu0 0
    %972 = vmatpush1.bf16.msra.mxu0 %v924
    %973 = vmatprep.mubr.bf16.mxu0 %v805
    %974 = vmatmul.mubr.bf16.gmra.mrb[0].mxu0 %v804
    %v975 = vpop.f32.mrb[0].mxu0
    %v976 = vadd.f32 %v843, %v975
    %v977 = vpop.f32.mrb[0].mxu0
    %v978 = vpop.f32.mrb[0].mxu0
    %v979 = vadd.f32 %v843, %v978
    %v980 = vpop.f32.mrb[0].mxu0
    %981 = vdwg.mxu0
    %vm982 = vcmp.gt.f32.partialorder %v976, 0.0
    %vm983 = vcmp.gt.f32.partialorder %v979, 0.0
    %v984 = vmul.f32 %v976, 0.2
    %v985 = vmul.f32 %v979, 0.2
    %v986 = vsel %vm982, %v976, %v984
    %v987 = vsel %vm983, %v979, %v985
    %v988 = vld [vmem:[%s7] sm:$0x1]
    %v990 = vlaneseq
    %v991 = vshrl.u32 %v990, 7
    %v992 = vsub.s32 0, %v991
    %v993 = vrot.slane %v988, %v992
    %v995 = vmul.f32 %v986, %v993
    %v996 = vmul.f32 %v987, %v993
    %997 = vadd.xlane.f32.xlu0 %v995
    %v998 = vpop.xlane.xlu0 %997
    %999 = vadd.xlane.f32.xlu0 %v996
    %v1000 = vpop.xlane.xlu0 %999
    %v1001 = vld [vmem:[#allocation2] sm:$0x1]
    %v1003 = vlaneseq
    %v1004 = vshrl.u32 %v1003, 7
    %v1005 = vsub.s32 0, %v1004
    %v1006 = vrot.slane %v1001, %v1005
    %v1008 = vadd.f32 %v998, %v1006
    %v1009 = vadd.f32 %v1000, %v1006
    %vm1010 = vcmask 7168
    %1011 = vst.msk [vmem:[%s9] sm:$0xff] %vm1010, %v1008
    %1012 = vst.msk [vmem:[%s9 + $0x8] sm:$0xff] %vm1010, %v1009
    // Predicated region
    $region54: #{tpu_custom_call.1} parent=1 // pred_check
      _
    $region55: #{tpu_custom_call.1} parent=1 // pred_check_branch
      %1014 = sbr.rel (0) target = $region57
    $region56: #{tpu_custom_call.1} parent=1 // pred_region
      _
    $region57: #{tpu_custom_call.1} parent=1 // pred_fallthru
      _
    // Predicated region
    $region58: #{tpu_custom_call.1} parent=1 // pred_check
      _
    $region59: #{tpu_custom_call.1} parent=1 // pred_check_branch
      %1016 = sbr.rel (0) target = $region61
    $region60: #{tpu_custom_call.1} parent=1 // pred_region
      _
    $region61: #{tpu_custom_call.1} parent=1 // pred_fallthru
      _
    %1017 = vsyncpa [#allocation4], 1
    %1018 = vsyncpa [#allocation6], 1
    %1019 = vsyncpa [#allocation9], 1

</llo_original>
